<compile_context>
chip_gen: v7x
topology: tpu7x:2x2x1
jax: 0.10.0
libtpu: 0.0.40
codegen_flags: <defaults>
</compile_context>

<pallas_src>
import functools

import jax
import jax.numpy as jnp
from jax.experimental import pallas as pl
from jax.experimental.pallas import tpu as pltpu


def cheb_lstm_kernel(graph_ref, z_ref, c_ref, w_ref, b_ref, hc_ref,
                     *, batch_block, n_nodes, hidden_dim, k_terms):
    f32 = jnp.float32
    Bb, N, H = batch_block, n_nodes, hidden_dim
    F = z_ref.shape[-1]                               # C + H (fused feature dim)

    z0 = z_ref[...].astype(f32)                       # (Bb*N, F), z = [x | h]
    zs = [z0]                                         # T0 = I -> identity term

    if k_terms > 1:
        A = graph_ref[...].astype(f32)                # (Bb, N, N)
        # D^{-1/2} from row sums (rsqrt -> EUP slot); computed once per step.
        deg = jnp.sum(A, axis=2, keepdims=True)       # (Bb, N, 1)
        d_is = jax.lax.rsqrt(deg)                     # (Bb, N, 1)
        # Fold the *output-side* diagonal scaling into A once (sublane
        # broadcast only, no transpose needed); the input-side scaling stays a
        # cheap per-term row broadcast on the features.
        a_hat = A * d_is                              # (Bb, N, N) = D^-1/2 A

        def lap_apply(z_flat):
            # L @ z = z - D^{-1/2} A D^{-1/2} z = z - a_hat @ (d^{-1/2} * z)
            z3 = z_flat.reshape(Bb, N, F)             # leading-dim split, N % 8 == 0
            az = jnp.einsum('bij,bjf->bif', a_hat, d_is * z3,
                            preferred_element_type=f32)
            return z_flat - az.reshape(Bb * N, F)

        z1 = lap_apply(z0)                            # T1 = L
        zs.append(z1)
        z_km2, z_km1 = z0, z1
        for _ in range(2, k_terms):                   # small static K -> unrolled
            zk = 2.0 * lap_apply(z_km1) - z_km2       # Tk = 2 L T_{k-1} - T_{k-2}
            zs.append(zk)
            z_km2, z_km1 = z_km1, zk

    # One wide-contraction MXU dot over all K+1 Chebyshev terms: depth (K+1)*F,
    # accumulation happens inside the MXU (no per-k pops / VPU adds).
    Z = jnp.concatenate(zs, axis=-1) if len(zs) > 1 else zs[0]   # (Bb*N, (K+1)*F)
    acc = jnp.dot(Z, w_ref[...].astype(f32), preferred_element_type=f32)
    acc = acc + b_ref[...].astype(f32)                # fused bias (1, 4H) broadcast

    # Gate order matches torch.split(combined, H, dim=2): i, f, o, g.
    i_g = jax.nn.sigmoid(acc[:, 0 * H:1 * H])
    f_g = jax.nn.sigmoid(acc[:, 1 * H:2 * H])
    o_g = jax.nn.sigmoid(acc[:, 2 * H:3 * H])
    g_g = jnp.tanh(acc[:, 3 * H:4 * H])

    c_cur = c_ref[...].astype(f32)                    # (Bb*N, H)
    c_next = f_g * c_cur + i_g * g_g
    h_next = o_g * jnp.tanh(c_next)

    # Single merged output block -> one out DMA per step, half the masked stores.
    hc_ref[...] = jnp.concatenate([h_next, c_next], axis=-1).astype(hc_ref.dtype)


def _vmem_capacity_bytes():
    try:
        return int(pltpu.get_tpu_info().vmem_capacity_bytes)
    except Exception:
        return 64 << 20                               # conservative (v7x-sized) fallback


def _pick_batch_block(B, N, C, H, Kp1, budget_bytes, two_core):
    """Largest divisor of B whose per-step VMEM footprint fits the budget,
    capped at B//2 on 2-TensorCore parts so the parallel grid has >= 2 steps."""
    if N % 8 != 0:
        return B                                      # keep full-dim blocks
    F = C + H
    per_sample = 4 * (
        2 * (N * N + N * F + N * H)                   # double-buffered input blocks
        + 2 * (N * 2 * H)                             # double-buffered merged output
        + 2 * N * N                                   # f32 A + d^-1/2-scaled A
        + (2 * Kp1 + 1) * N * F                       # z_k terms + concatenated Z
        + N * 4 * H + 6 * N * H                       # acc, gates, c/h temporaries
    )
    fixed = 4 * 2 * (Kp1 * F * 4 * H + 4 * H)         # resident weights + bias (x2 bufs)
    avail = max(budget_bytes - fixed, per_sample)
    bb = max(1, min(B, avail // per_sample))
    if two_core and B >= 2:
        bb = min(bb, B // 2)                          # >= 2 grid steps -> both TCs busy
    while B % bb:
        bb -= 1
    return bb


def cheb_lstm_cell(x, graph, h, c, w1, w2, b1, b2):
    B, N, C = x.shape
    H = h.shape[-1]
    Kp1 = w1.shape[0]
    F = C + H

    # Fuse the x/h feature paths and the two biases once, outside the kernel, and
    # flatten the per-order weights to one ((K+1)*F, 4H) matrix for the wide dot.
    z = jnp.concatenate([x, h], axis=-1).reshape(B * N, F)       # (B*N, C+H)
    w = jnp.concatenate([w1, w2], axis=1).reshape(Kp1 * F, 4 * H)
    b = (b1 + b2).reshape(1, 4 * H)                              # (1, 4H)
    c_flat = c.reshape(B * N, H)

    # Generation-aware budgets: 128 MiB VMEM parts (v5e/v6e) get a larger block
    # budget and limit; 64 MiB parts (v7x) get tighter budgets and 2-TC blocking.
    vmem_cap = _vmem_capacity_bytes()
    if vmem_cap >= (100 << 20):
        budget, vmem_limit, two_core = 40 << 20, 96 << 20, False
    else:
        budget, vmem_limit, two_core = 16 << 20, 32 << 20, True

    Bb = _pick_batch_block(B, N, C, H, Kp1, budget, two_core)
    kernel = functools.partial(cheb_lstm_kernel, batch_block=Bb,
                               n_nodes=N, hidden_dim=H, k_terms=Kp1)

    grid_spec = pltpu.PrefetchScalarGridSpec(
        num_scalar_prefetch=0,
        grid=(B // Bb,),
        in_specs=[
            pl.BlockSpec((Bb, N, N), lambda i: (i, 0, 0)),           # graph
            pl.BlockSpec((Bb * N, F), lambda i: (i, 0)),             # z = [x | h]
            pl.BlockSpec((Bb * N, H), lambda i: (i, 0)),             # c_cur
            pl.BlockSpec((Kp1 * F, 4 * H), lambda i: (0, 0)),        # fused W (resident)
            pl.BlockSpec((1, 4 * H), lambda i: (0, 0)),              # fused bias
        ],
        out_specs=pl.BlockSpec((Bb * N, 2 * H), lambda i: (i, 0)),   # [h_next | c_next]
    )
    hc = pl.pallas_call(
        kernel,
        out_shape=jax.ShapeDtypeStruct((B * N, 2 * H), jnp.float32),
        grid_spec=grid_spec,
        compiler_params=pltpu.CompilerParams(
            dimension_semantics=("parallel",),       # batch axis independent
            vmem_limit_bytes=vmem_limit),
    )(graph, z, c_flat, w, b)

    h_next = hc[:, :H].reshape(B, N, H)
    c_next = hc[:, H:].reshape(B, N, H)
    return h_next, c_next


def ref_cheb_lstm(x, graph, h, c, w1, w2, b1, b2):
    """Pure-JAX reference mirroring the PyTorch module (per-batch loop + concat)."""
    B, N, _ = x.shape
    H = h.shape[-1]
    Kp1 = w1.shape[0]
    hs, cs = [], []
    for i in range(B):
        A = graph[i]
        d = jnp.sum(A, axis=-1) ** -0.5
        L = jnp.eye(N) - (A * d[:, None]) * d[None, :]
        Ts = [jnp.eye(N), L]
        for k in range(2, Kp1):
            Ts.append(2.0 * (L @ Ts[k - 1]) - Ts[k - 2])
        Ts = Ts[:Kp1]
        pre = jnp.zeros((N, 4 * H), jnp.float32)
        for k in range(Kp1):
            pre = pre + (Ts[k] @ x[i]) @ w1[k] + (Ts[k] @ h[i]) @ w2[k]
        pre = pre + b1[0] + b2[0]
        ig = jax.nn.sigmoid(pre[:, :H])
        fg = jax.nn.sigmoid(pre[:, H:2 * H])
        og = jax.nn.sigmoid(pre[:, 2 * H:3 * H])
        gg = jnp.tanh(pre[:, 3 * H:])
        cn = fg * c[i] + ig * gg
        hn = og * jnp.tanh(cn)
        hs.append(hn)
        cs.append(cn)
    return jnp.stack(hs), jnp.stack(cs)


if __name__ == "__main__":
    # Small shapes consistent with the module: batch=2, nodes=16, input_dim=4,
    # hidden_dim=32, kernel_size (Chebyshev order) K=2 -> K+1=3 polynomial terms.
    B, N, C, H, K = 2, 16, 4, 32, 2
    Kp1 = K + 1

    key = jax.random.PRNGKey(0)
    k_x, k_g, k_w1, k_w2 = jax.random.split(key, 4)

    x = jax.random.normal(k_x, (B, N, C), jnp.float32)
    # positive weighted adjacency -> strictly positive degrees (matches D^{-1/2};
    # zero-degree rows would produce inf/NaN in BOTH kernel and reference).
    graph = jax.random.uniform(k_g, (B, N, N), jnp.float32, minval=0.1, maxval=1.0)

    # deterministic "xavier-normal"-style init matching ChebConv param shapes
    w1 = jax.random.normal(k_w1, (Kp1, C, 4 * H), jnp.float32) * (2.0 / (C + 4 * H)) ** 0.5
    w2 = jax.random.normal(k_w2, (Kp1, H, 4 * H), jnp.float32) * (2.0 / (H + 4 * H)) ** 0.5
    b1 = jnp.zeros((1, 4 * H), jnp.float32)
    b2 = jnp.zeros((1, 4 * H), jnp.float32)

    # initial hidden state (init_hidden -> zeros)
    h0 = jnp.zeros((B, N, H), jnp.float32)
    c0 = jnp.zeros((B, N, H), jnp.float32)

    h_next, c_next = cheb_lstm_cell(x, graph, h0, c0, w1, w2, b1, b2)
    jax.block_until_ready((h_next, c_next))

    h_ref, c_ref = ref_cheb_lstm(x, graph, h0, c0, w1, w2, b1, b2)
    assert jnp.allclose(h_next, h_ref, atol=1e-4, rtol=1e-4), "h_next mismatch"
    assert jnp.allclose(c_next, c_ref, atol=1e-4, rtol=1e-4), "c_next mismatch"

    print("KERNEL_OK")
</pallas_src>

<mosaic_0001>
module attributes {stable_mosaic.version = 11 : i64} {
  func.func @cheb_lstm_kernel(%arg0: i32, %arg1: memref<1x16x16xf32, #tpu.memory_space<vmem>>, %arg2: memref<16x36xf32, #tpu.memory_space<vmem>>, %arg3: memref<16x32xf32, #tpu.memory_space<vmem>>, %arg4: memref<108x128xf32, #tpu.memory_space<vmem>>, %arg5: memref<1x128xf32, #tpu.memory_space<vmem>>, %arg6: memref<16x64xf32, #tpu.memory_space<vmem>>) attributes {dimension_semantics = [#tpu.dimension_semantics<parallel>], iteration_bounds = array<i64: 2>, scalar_prefetch = 0 : i64, scratch_operands = 0 : i64, tpu.core_type = #tpu.core_type<tc>, window_params = [{transform_indices = @transform_0, window_bounds = array<i64: 1, 16, 16>}, {transform_indices = @transform_1, window_bounds = array<i64: 16, 36>}, {transform_indices = @transform_2, window_bounds = array<i64: 16, 32>}, {pipeline_mode = #tpu.pipeline_mode<synchronous>, transform_indices = @transform_3, window_bounds = array<i64: 108, 128>}, {pipeline_mode = #tpu.pipeline_mode<synchronous>, transform_indices = @transform_4, window_bounds = array<i64: 1, 128>}, {transform_indices = @transform_5, window_bounds = array<i64: 16, 64>}]} {
    %c0 = arith.constant 0 : index
    %c0_0 = arith.constant 0 : index
    %0 = vector.load %arg2[%c0, %c0_0] : memref<16x36xf32, #tpu.memory_space<vmem>>, vector<16x36xf32>
    %c0_1 = arith.constant 0 : index
    %c0_2 = arith.constant 0 : index
    %c0_3 = arith.constant 0 : index
    %1 = vector.load %arg1[%c0_1, %c0_2, %c0_3] : memref<1x16x16xf32, #tpu.memory_space<vmem>>, vector<1x16x16xf32>
    %cst = arith.constant dense<0.000000e+00> : vector<1x16xf32>
    %2 = vector.multi_reduction <add>, %1, %cst [2] : vector<1x16x16xf32> to vector<1x16xf32>
    %3 = vector.shape_cast %2 : vector<1x16xf32> to vector<1x16x1xf32>
    %4 = math.rsqrt %3 : vector<1x16x1xf32>
    %5 = vector.broadcast %4 : vector<1x16x1xf32> to vector<1x16x16xf32>
    %6 = arith.mulf %1, %5 : vector<1x16x16xf32>
    %7 = vector.shape_cast %0 : vector<16x36xf32> to vector<1x16x36xf32>
    %8 = vector.broadcast %4 : vector<1x16x1xf32> to vector<1x16x36xf32>
    %9 = arith.mulf %8, %7 : vector<1x16x36xf32>
    "tpu.trace_start"() <{level = 10 : i32, message = "bij,bjf->bif"}> : () -> ()
    %cst_4 = arith.constant dense<0.000000e+00> : vector<1x16x36xf32>
    %10 = tpu.matmul %6, %9, %cst_4 {dimension_numbers = #tpu.dot_dimension_numbers<[2], [1], [1], [2], [0, 0, 0, 1, 1, 2], [0], [0]>} : vector<1x16x16xf32>, vector<1x16x36xf32>, vector<1x16x36xf32> -> vector<1x16x36xf32>
    "tpu.trace_stop"() : () -> ()
    %11 = vector.shape_cast %10 : vector<1x16x36xf32> to vector<16x36xf32>
    %12 = arith.subf %0, %11 : vector<16x36xf32>
    %13 = vector.shape_cast %12 : vector<16x36xf32> to vector<1x16x36xf32>
    %14 = vector.broadcast %4 : vector<1x16x1xf32> to vector<1x16x36xf32>
    %15 = arith.mulf %14, %13 : vector<1x16x36xf32>
    "tpu.trace_start"() <{level = 10 : i32, message = "bij,bjf->bif"}> : () -> ()
    %cst_5 = arith.constant dense<0.000000e+00> : vector<1x16x36xf32>
    %16 = tpu.matmul %6, %15, %cst_5 {dimension_numbers = #tpu.dot_dimension_numbers<[2], [1], [1], [2], [0, 0, 0, 1, 1, 2], [0], [0]>} : vector<1x16x16xf32>, vector<1x16x36xf32>, vector<1x16x36xf32> -> vector<1x16x36xf32>
    "tpu.trace_stop"() : () -> ()
    %17 = vector.shape_cast %16 : vector<1x16x36xf32> to vector<16x36xf32>
    %18 = arith.subf %12, %17 : vector<16x36xf32>
    %cst_6 = arith.constant 2.000000e+00 : f32
    %19 = vector.broadcast %cst_6 : f32 to vector<16x36xf32>
    %20 = arith.mulf %19, %18 : vector<16x36xf32>
    %21 = arith.subf %20, %0 : vector<16x36xf32>
    %22 = tpu.concatenate %0, %12, %21 in 1 : vector<16x36xf32>, vector<16x36xf32>, vector<16x36xf32> -> vector<16x108xf32>
    %c0_7 = arith.constant 0 : index
    %c0_8 = arith.constant 0 : index
    %23 = vector.load %arg4[%c0_7, %c0_8] : memref<108x128xf32, #tpu.memory_space<vmem>>, vector<108x128xf32>
    %cst_9 = arith.constant dense<0.000000e+00> : vector<16x128xf32>
    %24 = tpu.matmul %22, %23, %cst_9 {dimension_numbers = #tpu.dot_dimension_numbers<[1], [0], [0], [1], [0, 0, 1, 1], [], []>} : vector<16x108xf32>, vector<108x128xf32>, vector<16x128xf32> -> vector<16x128xf32>
    %c0_10 = arith.constant 0 : index
    %c0_11 = arith.constant 0 : index
    %25 = vector.load %arg5[%c0_10, %c0_11] : memref<1x128xf32, #tpu.memory_space<vmem>>, vector<1x128xf32>
    %26 = vector.broadcast %25 : vector<1x128xf32> to vector<16x128xf32>
    %27 = arith.addf %24, %26 : vector<16x128xf32>
    %28 = vector.extract_strided_slice %27 {offsets = [0, 0], sizes = [16, 32], strides = [1, 1]} : vector<16x128xf32> to vector<16x32xf32>
    %29 = arith.negf %28 : vector<16x32xf32>
    %30 = math.exp %29 : vector<16x32xf32>
    %cst_12 = arith.constant 1.000000e+00 : f32
    %31 = vector.broadcast %cst_12 : f32 to vector<16x32xf32>
    %32 = arith.addf %31, %30 : vector<16x32xf32>
    %33 = arith.divf %31, %32 : vector<16x32xf32>
    %34 = vector.extract_strided_slice %27 {offsets = [0, 32], sizes = [16, 32], strides = [1, 1]} : vector<16x128xf32> to vector<16x32xf32>
    %35 = arith.negf %34 : vector<16x32xf32>
    %36 = math.exp %35 : vector<16x32xf32>
    %cst_13 = arith.constant 1.000000e+00 : f32
    %37 = vector.broadcast %cst_13 : f32 to vector<16x32xf32>
    %38 = arith.addf %37, %36 : vector<16x32xf32>
    %39 = arith.divf %37, %38 : vector<16x32xf32>
    %40 = vector.extract_strided_slice %27 {offsets = [0, 64], sizes = [16, 32], strides = [1, 1]} : vector<16x128xf32> to vector<16x32xf32>
    %41 = arith.negf %40 : vector<16x32xf32>
    %42 = math.exp %41 : vector<16x32xf32>
    %cst_14 = arith.constant 1.000000e+00 : f32
    %43 = vector.broadcast %cst_14 : f32 to vector<16x32xf32>
    %44 = arith.addf %43, %42 : vector<16x32xf32>
    %45 = arith.divf %43, %44 : vector<16x32xf32>
    %46 = vector.extract_strided_slice %27 {offsets = [0, 96], sizes = [16, 32], strides = [1, 1]} : vector<16x128xf32> to vector<16x32xf32>
    %47 = math.tanh %46 : vector<16x32xf32>
    %c0_15 = arith.constant 0 : index
    %c0_16 = arith.constant 0 : index
    %48 = vector.load %arg3[%c0_15, %c0_16] : memref<16x32xf32, #tpu.memory_space<vmem>>, vector<16x32xf32>
    %49 = arith.mulf %39, %48 : vector<16x32xf32>
    %50 = arith.mulf %33, %47 : vector<16x32xf32>
    %51 = arith.addf %49, %50 : vector<16x32xf32>
    %52 = math.tanh %51 : vector<16x32xf32>
    %53 = arith.mulf %45, %52 : vector<16x32xf32>
    %54 = tpu.concatenate %53, %51 in 1 : vector<16x32xf32>, vector<16x32xf32> -> vector<16x64xf32>
    %c0_17 = arith.constant 0 : index
    %c0_18 = arith.constant 0 : index
    %55 = vector.load %arg6[%c0_17, %c0_18] : memref<16x64xf32, #tpu.memory_space<vmem>>, vector<16x64xf32>
    tpu.vector_store %arg6[%c0_17, %c0_18], %54 {strides = array<i32>} : memref<16x64xf32, #tpu.memory_space<vmem>>, vector<16x64xf32>,
    return
  }
  func.func @transform_0(%arg0: i32) -> (i32, i32, i32) {
    %c0_i32 = arith.constant 0 : i32
    %c0_i32_0 = arith.constant 0 : i32
    %c0_i32_1 = arith.constant 0 : i32
    return %arg0, %c0_i32, %c0_i32_0 : i32, i32, i32
  }
  func.func @transform_1(%arg0: i32) -> (i32, i32) {
    %c0_i32 = arith.constant 0 : i32
    %c0_i32_0 = arith.constant 0 : i32
    return %arg0, %c0_i32 : i32, i32
  }
  func.func @transform_2(%arg0: i32) -> (i32, i32) {
    %c0_i32 = arith.constant 0 : i32
    %c0_i32_0 = arith.constant 0 : i32
    return %arg0, %c0_i32 : i32, i32
  }
  func.func @transform_3(%arg0: i32) -> (i32, i32) {
    %c0_i32 = arith.constant 0 : i32
    %c0_i32_0 = arith.constant 0 : i32
    %c0_i32_1 = arith.constant 0 : i32
    return %c0_i32, %c0_i32_0 : i32, i32
  }
  func.func @transform_4(%arg0: i32) -> (i32, i32) {
    %c0_i32 = arith.constant 0 : i32
    %c0_i32_0 = arith.constant 0 : i32
    %c0_i32_1 = arith.constant 0 : i32
    return %c0_i32, %c0_i32_0 : i32, i32
  }
  func.func @transform_5(%arg0: i32) -> (i32, i32) {
    %c0_i32 = arith.constant 0 : i32
    %c0_i32_0 = arith.constant 0 : i32
    return %arg0, %c0_i32 : i32, i32
  }
}

</mosaic_0001>

<llo_original>
// kernel: tpu_custom_call.1
$region0: #{tpu_custom_call.1}
  #allocation0 [shape = 'u32[]', space=smem, size = 0x4, offset = 0x4, fixed_abs, tag = 'smem constant byte address 0x4 - core index']
  #allocation1 [shape = 'u32[144,128]{1,0:T(1,128)}', space=vmem, size = 0x12000, scoped, tag = 'internal scratch']
  %s0 = inlined_call_operand.hbm [shape: f32[2,16,16], index: 0, kind: input, shape index: {}]
  %s1 = inlined_call_operand.hbm [shape: f32[32,36], index: 1, kind: input, shape index: {}]
  %s2 = inlined_call_operand.hbm [shape: f32[32,32], index: 2, kind: input, shape index: {}]
  %s3 = inlined_call_operand.hbm [shape: f32[108,128], index: 3, kind: input, shape index: {}]
  %s4 = inlined_call_operand.vmem [shape: f32[1,128], index: 4, kind: input, shape index: {}]
  %s5 = inlined_call_operand.hbm [shape: f32[32,64], index: 5, kind: output, shape index: {}]
  %s6 = sld [smem:[#allocation0]]
  $region69: #{tpu_custom_call.1} parent=0
    _
  %s8 = ssub.s32 1, %s6
  %s9 = scalar_select 0, %s8, %s6
  $region1: #{tpu_custom_call.1} parent=0
    #allocation2 [shape = 'u8[16384]{0}', space=vmem, size = 0x4000, scoped, tag = 'input window, operand 0']
    #allocation3 [shape = 's32[2]{0}', space=sflag, size = 0x8, scoped, tag = 'scoped memory for tpu_custom_call.1']
    #allocation4 [shape = 's32[2]{0}', space=sflag, size = 0x8, scoped, tag = 'scoped memory for tpu_custom_call.1']
    #allocation5 [shape = 'u8[16384]{0}', space=vmem, size = 0x4000, scoped, tag = 'input window, operand 1']
    #allocation6 [shape = 's32[2]{0}', space=sflag, size = 0x8, scoped, tag = 'scoped memory for tpu_custom_call.1']
    #allocation7 [shape = 'u8[16384]{0}', space=vmem, size = 0x4000, scoped, tag = 'input window, operand 2']
    #allocation8 [shape = 'u8[57344]{0}', space=vmem, size = 0xe000, scoped, tag = 'input window, operand 3, single buffered']
    #allocation9 [shape = 's32[1]{0}', space=sflag, size = 0x4, scoped, tag = 'scoped memory for tpu_custom_call.1']
    #allocation10 [shape = 'u8[16384]{0}', space=vmem, size = 0x4000, scoped, tag = 'output window, operand 0']
    %10 = vsyncpa [#allocation3], 0
    %s11 = scalar_lea.sflag [#allocation3], 1
    %12 = vsyncpa %s11, 0
    %13 = vsyncpa [#allocation6], 0
    %s14 = scalar_lea.sflag [#allocation6], 1
    %15 = vsyncpa %s14, 0
    %16 = vsyncpa [#allocation9], 0
    %17 = vsyncpa [#allocation4], 0
    %s18 = scalar_lea.sflag [#allocation4], 1
    %19 = vsyncpa %s18, 0
    loop: start=0, step=1, limit=4
    $region2: #{tpu_custom_call.1} parent=1 // loop_pre_header
      _
    $region3: #{tpu_custom_call.1} parent=1 // loop_header
      %s21 = sphi 0, %s25
      %p22 = scmp.ge.s32.totalorder %s21, 4
      %s31 = sphi 0, %s33
      %s34 = sphi 0, %s31
      %s35 = sphi 0, %s34
      %s51 = sphi 0, %s35
      %s57 = sphi 0, %s59
      %s60 = sphi 0, %s57
      %s61 = sphi 0, %s60
      %s77 = sphi 0, %s61
      %s83 = sphi 0, %s85
      %s86 = sphi 0, %s83
      %s87 = sphi 0, %s86
      %s103 = sphi 0, %s87
      %s107 = sphi 0, %s107
      %s109 = sphi 0, %s107
      %s110 = sphi 0, %s109
      %s124 = sphi 0, %s110
      %s128 = sphi 0, %s128
      %s130 = sphi 0, %s128
      %s131 = sphi 0, %s130
      %s145 = sphi 0, %s131
      %s151 = sphi 0, %s153
      %s154 = sphi 0, %s151
      %s155 = sphi 0, %s154
      %s171 = sphi 0, %s155
    $region4: #{tpu_custom_call.1} parent=1 // loop_header_branch
      %24 = sbr.rel (%p22) target = $region8
    $region5: #{tpu_custom_call.1} parent=1 // loop_body
      %s26 = ssub.s32 %s21, 1
      %s27 = ssub.s32 %s21, 2
      %s28 = sadd.s32 %s21, 1
      %s29 = ssub.s32 %s21, %s28
      %p30 = scmp.eq.s32.totalorder %s29, 0
      %s32 = sadd.s32 %s31, 1
      %s33 = scalar_select %p30, %s31, %s32
      %p36 = pneg %p30
      %p37 = scmp.eq.s32.totalorder %s21, 1
      %p38 = por %p36, %p37
      %p39 = scmp.ne.s32.totalorder %s31, %s34
      %p40 = scmp.eq.s32.totalorder %s21, 0
      %p41 = por %p39, %p40
      %p42 = scmp.ne.s32.totalorder %s31, %s34
      %p43 = scmp.eq.s32.totalorder %s26, 1
      %p44 = por %p42, %p43
      %p45 = scmp.ne.s32.totalorder %s34, %s35
      %p46 = scmp.eq.s32.totalorder %s26, 0
      %p47 = por %p45, %p46
      %p48 = scmp.ne.s32.totalorder %s34, %s35
      %p49 = scmp.eq.s32.totalorder %s27, 1
      %p50 = por %p48, %p49
      %p52 = scmp.ne.s32.totalorder %s35, %s51
      %p53 = scmp.eq.s32.totalorder %s27, 0
      %p54 = por %p52, %p53
      %s55 = ssub.s32 %s21, %s28
      %p56 = scmp.eq.s32.totalorder %s55, 0
      %s58 = sadd.s32 %s57, 1
      %s59 = scalar_select %p56, %s57, %s58
      %p62 = pneg %p56
      %p63 = scmp.eq.s32.totalorder %s21, 1
      %p64 = por %p62, %p63
      %p65 = scmp.ne.s32.totalorder %s57, %s60
      %p66 = scmp.eq.s32.totalorder %s21, 0
      %p67 = por %p65, %p66
      %p68 = scmp.ne.s32.totalorder %s57, %s60
      %p69 = scmp.eq.s32.totalorder %s26, 1
      %p70 = por %p68, %p69
      %p71 = scmp.ne.s32.totalorder %s60, %s61
      %p72 = scmp.eq.s32.totalorder %s26, 0
      %p73 = por %p71, %p72
      %p74 = scmp.ne.s32.totalorder %s60, %s61
      %p75 = scmp.eq.s32.totalorder %s27, 1
      %p76 = por %p74, %p75
      %p78 = scmp.ne.s32.totalorder %s61, %s77
      %p79 = scmp.eq.s32.totalorder %s27, 0
      %p80 = por %p78, %p79
      %s81 = ssub.s32 %s21, %s28
      %p82 = scmp.eq.s32.totalorder %s81, 0
      %s84 = sadd.s32 %s83, 1
      %s85 = scalar_select %p82, %s83, %s84
      %p88 = pneg %p82
      %p89 = scmp.eq.s32.totalorder %s21, 1
      %p90 = por %p88, %p89
      %p91 = scmp.ne.s32.totalorder %s83, %s86
      %p92 = scmp.eq.s32.totalorder %s21, 0
      %p93 = por %p91, %p92
      %p94 = scmp.ne.s32.totalorder %s83, %s86
      %p95 = scmp.eq.s32.totalorder %s26, 1
      %p96 = por %p94, %p95
      %p97 = scmp.ne.s32.totalorder %s86, %s87
      %p98 = scmp.eq.s32.totalorder %s26, 0
      %p99 = por %p97, %p98
      %p100 = scmp.ne.s32.totalorder %s86, %s87
      %p101 = scmp.eq.s32.totalorder %s27, 1
      %p102 = por %p100, %p101
      %p104 = scmp.ne.s32.totalorder %s87, %s103
      %p105 = scmp.eq.s32.totalorder %s27, 0
      %p106 = por %p104, %p105
      %s108 = sadd.s32 %s107, 1
      %p111 = scmp.eq.s32.totalorder %s21, 1
      %p112 = scmp.ne.s32.totalorder %s107, %s109
      %p113 = scmp.eq.s32.totalorder %s21, 0
      %p114 = por %p112, %p113
      %p115 = scmp.ne.s32.totalorder %s107, %s109
      %p116 = scmp.eq.s32.totalorder %s26, 1
      %p117 = por %p115, %p116
      %p118 = scmp.ne.s32.totalorder %s109, %s110
      %p119 = scmp.eq.s32.totalorder %s26, 0
      %p120 = por %p118, %p119
      %p121 = scmp.ne.s32.totalorder %s109, %s110
      %p122 = scmp.eq.s32.totalorder %s27, 1
      %p123 = por %p121, %p122
      %p125 = scmp.ne.s32.totalorder %s110, %s124
      %p126 = scmp.eq.s32.totalorder %s27, 0
      %p127 = por %p125, %p126
      %s129 = sadd.s32 %s128, 1
      %p132 = scmp.eq.s32.totalorder %s21, 1
      %p133 = scmp.ne.s32.totalorder %s128, %s130
      %p134 = scmp.eq.s32.totalorder %s21, 0
      %p135 = por %p133, %p134
      %p136 = scmp.ne.s32.totalorder %s128, %s130
      %p137 = scmp.eq.s32.totalorder %s26, 1
      %p138 = por %p136, %p137
      %p139 = scmp.ne.s32.totalorder %s130, %s131
      %p140 = scmp.eq.s32.totalorder %s26, 0
      %p141 = por %p139, %p140
      %p142 = scmp.ne.s32.totalorder %s130, %s131
      %p143 = scmp.eq.s32.totalorder %s27, 1
      %p144 = por %p142, %p143
      %p146 = scmp.ne.s32.totalorder %s131, %s145
      %p147 = scmp.eq.s32.totalorder %s27, 0
      %p148 = por %p146, %p147
      %s149 = ssub.s32 %s21, %s28
      %p150 = scmp.eq.s32.totalorder %s149, 0
      %s152 = sadd.s32 %s151, 1
      %s153 = scalar_select %p150, %s151, %s152
      %p156 = pneg %p150
      %p157 = scmp.eq.s32.totalorder %s21, 1
      %p158 = por %p156, %p157
      %p159 = scmp.ne.s32.totalorder %s151, %s154
      %p160 = scmp.eq.s32.totalorder %s21, 0
      %p161 = por %p159, %p160
      %p162 = scmp.ne.s32.totalorder %s151, %s154
      %p163 = scmp.eq.s32.totalorder %s26, 1
      %p164 = por %p162, %p163
      %p165 = scmp.ne.s32.totalorder %s154, %s155
      %p166 = scmp.eq.s32.totalorder %s26, 0
      %p167 = por %p165, %p166
      %p168 = scmp.ne.s32.totalorder %s154, %s155
      %p169 = scmp.eq.s32.totalorder %s27, 1
      %p170 = por %p168, %p169
      %p172 = scmp.ne.s32.totalorder %s155, %s171
      %p173 = scmp.eq.s32.totalorder %s27, 0
      %p174 = por %p172, %p173
      %p175 = scmp.le.s32.totalorder 1, %s21
      %p176 = scmp.lt.s32.totalorder %s21, 3
      %p177 = pnand %p175, %p176
      %p178 = pneg %p177
      // Predicated region
      $region9: #{tpu_custom_call.1} parent=5 // pred_check
        _
      $region10: #{tpu_custom_call.1} parent=5 // pred_check_branch
        %180 = sbr.rel (%p177) target = $region12
      $region11: #{tpu_custom_call.1} parent=5 // pred_region
        %s181 = ssub.s32 %s21, 1
        // Predicated region
        $region13: #{tpu_custom_call.1} parent=11 // pred_check
          %p182 = pneg %p120
        $region14: #{tpu_custom_call.1} parent=11 // pred_check_branch
          %184 = sbr.rel (%p182) target = $region16
        $region15: #{tpu_custom_call.1} parent=11 // pred_region
          %s186 = ssub.s32 1792, 1792
          %187 = vsyncadd [#allocation9], %s186
          %s188 = sshll.u32 [#allocation8], 4
          %s189 = int_to_ptr.vmem [resolvable:$true] %s188
          %194 = dma.hbm_to_vmem [thread:$0]  %s3, 1792, %s189, [#allocation9], 128, 128, 8
        $region16: #{tpu_custom_call.1} parent=11 // pred_fallthru
          _
        // Predicated region
        $region17: #{tpu_custom_call.1} parent=11 // pred_check
          %p195 = pneg %p141
        $region18: #{tpu_custom_call.1} parent=11 // pred_check_branch
          %197 = sbr.rel (%p195) target = $region20
        $region19: #{tpu_custom_call.1} parent=11 // pred_region
          _
        $region20: #{tpu_custom_call.1} parent=11 // pred_fallthru
          _
      $region12: #{tpu_custom_call.1} parent=5 // pred_fallthru
        _
      %p198 = scmp.lt.s32.totalorder %s21, 2
      // Predicated region
      $region21: #{tpu_custom_call.1} parent=5 // pred_check
        %p199 = pneg %p198
      $region22: #{tpu_custom_call.1} parent=5 // pred_check_branch
        %201 = sbr.rel (%p199) target = $region24
      $region23: #{tpu_custom_call.1} parent=5 // pred_region
        // Predicated region
        $region25: #{tpu_custom_call.1} parent=23 // pred_check
          %p202 = pneg %p41
        $region26: #{tpu_custom_call.1} parent=23 // pred_check_branch
          %204 = sbr.rel (%p202) target = $region28
        $region27: #{tpu_custom_call.1} parent=23 // pred_region
          %s205 = sand.u32 %s31, 1
          %s206 = scalar_lea.sflag [#allocation3], %s205
          %s207 = sand.u32 %s31, 1
          %s208 = smul.addr %s207, 16
          %s209 = scalar_lea.vmem [#allocation2], %s208
          %s211 = ssub.s32 256, 256
          %212 = vsyncadd %s206, %s211
          %s213 = smul.addr %s21, 2
          %s214 = smul.addr %s213, 128
          %s215 = scalar_lea.hbm %s0, %s214
          %s216 = sshll.u32 %s209, 4
          %s217 = int_to_ptr.vmem [resolvable:$true] %s216
          %222 = dma.hbm_to_vmem [thread:$0]  %s215, 256, %s217, %s206, 128, 128, 8
        $region28: #{tpu_custom_call.1} parent=23 // pred_fallthru
          _
        // Predicated region
        $region29: #{tpu_custom_call.1} parent=23 // pred_check
          %p223 = pneg %p67
        $region30: #{tpu_custom_call.1} parent=23 // pred_check_branch
          %225 = sbr.rel (%p223) target = $region32
        $region31: #{tpu_custom_call.1} parent=23 // pred_region
          %s226 = sand.u32 %s21, 1
          %s227 = scalar_lea.sflag [#allocation6], %s226
          %s228 = sand.u32 %s57, 1
          %s229 = smul.addr %s228, 16
          %s230 = scalar_lea.vmem [#allocation5], %s229
          %s231 = smul.u32 2, %s21
          %s233 = ssub.s32 256, 256
          %234 = vsyncadd %s227, %s233
          %s235 = smul.addr %s231, 128
          %s236 = scalar_lea.hbm %s1, %s235
          %s237 = sshll.u32 %s230, 4
          %s238 = int_to_ptr.vmem [resolvable:$true] %s237
          %243 = dma.hbm_to_vmem [thread:$0]  %s236, 256, %s238, %s227, 128, 128, 8
        $region32: #{tpu_custom_call.1} parent=23 // pred_fallthru
          _
        // Predicated region
        $region33: #{tpu_custom_call.1} parent=23 // pred_check
          %p244 = pneg %p93
        $region34: #{tpu_custom_call.1} parent=23 // pred_check_branch
          %246 = sbr.rel (%p244) target = $region36
        $region35: #{tpu_custom_call.1} parent=23 // pred_region
          %s247 = sand.u32 %s21, 1
          %s248 = scalar_lea.sflag [#allocation6], %s247
          %s249 = sand.u32 %s83, 1
          %s250 = smul.addr %s249, 16
          %s251 = scalar_lea.vmem [#allocation7], %s250
          %s252 = smul.u32 2, %s21
          %s254 = ssub.s32 256, 256
          %255 = vsyncadd %s248, %s254
          %s256 = smul.addr %s252, 128
          %s257 = scalar_lea.hbm %s2, %s256
          %s258 = sshll.u32 %s251, 4
          %s259 = int_to_ptr.vmem [resolvable:$true] %s258
          %264 = dma.hbm_to_vmem [thread:$0]  %s257, 256, %s259, %s248, 128, 128, 8
        $region36: #{tpu_custom_call.1} parent=23 // pred_fallthru
          _
      $region24: #{tpu_custom_call.1} parent=5 // pred_fallthru
        _
      %p265 = scmp.le.s32.totalorder 1, %s21
      %p266 = scmp.lt.s32.totalorder %s21, 3
      %p267 = pnand %p265, %p266
      %p268 = pneg %p267
      // Predicated region
      $region37: #{tpu_custom_call.1} parent=5 // pred_check
        _
      $region38: #{tpu_custom_call.1} parent=5 // pred_check_branch
        %270 = sbr.rel (%p267) target = $region40
      $region39: #{tpu_custom_call.1} parent=5 // pred_region
        %s271 = ssub.s32 %s21, 1
        %s272 = sand.u32 %s34, 1
        %s273 = scalar_lea.sflag [#allocation3], %s272
        %s274 = sand.u32 %s34, 1
        %s275 = smul.addr %s274, 16
        %s276 = scalar_lea.vmem [#allocation2], %s275
        // Predicated region
        $region41: #{tpu_custom_call.1} parent=39 // pred_check
          %p277 = pneg %p47
        $region42: #{tpu_custom_call.1} parent=39 // pred_check_branch
          %279 = sbr.rel (%p277) target = $region44
        $region43: #{tpu_custom_call.1} parent=39 // pred_region
          %280 = dma.done %s273, 256
        $region44: #{tpu_custom_call.1} parent=39 // pred_fallthru
          _
        %s281 = sand.u32 %s26, 1
        %s282 = scalar_lea.sflag [#allocation6], %s281
        %s283 = sand.u32 %s60, 1
        %s284 = smul.addr %s283, 16
        %s285 = scalar_lea.vmem [#allocation5], %s284
        // Predicated region
        $region45: #{tpu_custom_call.1} parent=39 // pred_check
          %p286 = pneg %p73
        $region46: #{tpu_custom_call.1} parent=39 // pred_check_branch
          %288 = sbr.rel (%p286) target = $region48
        $region47: #{tpu_custom_call.1} parent=39 // pred_region
          %289 = dma.done %s282, 256
        $region48: #{tpu_custom_call.1} parent=39 // pred_fallthru
          _
        %s290 = sand.u32 %s26, 1
        %s291 = scalar_lea.sflag [#allocation6], %s290
        %s292 = sand.u32 %s86, 1
        %s293 = smul.addr %s292, 16
        %s294 = scalar_lea.vmem [#allocation7], %s293
        // Predicated region
        $region49: #{tpu_custom_call.1} parent=39 // pred_check
          %p295 = pneg %p99
        $region50: #{tpu_custom_call.1} parent=39 // pred_check_branch
          %297 = sbr.rel (%p295) target = $region52
        $region51: #{tpu_custom_call.1} parent=39 // pred_region
          %298 = dma.done %s291, 256
        $region52: #{tpu_custom_call.1} parent=39 // pred_fallthru
          _
        // Predicated region
        $region53: #{tpu_custom_call.1} parent=39 // pred_check
          %p299 = pneg %p120
        $region54: #{tpu_custom_call.1} parent=39 // pred_check_branch
          %301 = sbr.rel (%p299) target = $region56
        $region55: #{tpu_custom_call.1} parent=39 // pred_region
          %302 = dma.done [#allocation9], 1792
        $region56: #{tpu_custom_call.1} parent=39 // pred_fallthru
          _
        %s303 = sand.u32 %s34, 1
        %s304 = scalar_lea.sflag [#allocation3], %s303
        %s305 = sand.u32 %s34, 1
        %s306 = smul.addr %s305, 16
        %s307 = scalar_lea.vmem [#allocation2], %s306
        %p308 = pneg %p47
        %p309 = pneg %p44
        %s310 = sand.u32 %s26, 1
        %s311 = scalar_lea.sflag [#allocation6], %s310
        %s312 = sand.u32 %s60, 1
        %s313 = smul.addr %s312, 16
        %s314 = scalar_lea.vmem [#allocation5], %s313
        %p315 = pneg %p73
        %p316 = pneg %p70
        %s317 = sand.u32 %s26, 1
        %s318 = scalar_lea.sflag [#allocation6], %s317
        %s319 = sand.u32 %s86, 1
        %s320 = smul.addr %s319, 16
        %s321 = scalar_lea.vmem [#allocation7], %s320
        %p322 = pneg %p99
        %p323 = pneg %p96
        %p324 = pneg %p120
        %p325 = pneg %p117
        %p326 = pneg %p141
        %p327 = pneg %p138
        %p328 = pneg %p167
        %p329 = pneg %p164
        %s330 = sand.u32 %s154, 1
        %s331 = scalar_lea.sflag [#allocation4], %s330
        %s332 = sand.u32 %s154, 1
        %s333 = smul.addr %s332, 16
        %s334 = scalar_lea.vmem [#allocation10], %s333
        %s335 = smul.u32 2, %s26
        %s336 = smul.u32 2, %s26
        %s337 = smul.u32 2, %s26
        %v338 = vld [vmem:[%s285] sm:$0xff]
        %v339 = vld [vmem:[%s285 + $0x8] sm:$0xff]
        %v340 = vld [vmem:[%s276] sm:$0xff]
        %v341 = vld [vmem:[%s276 + $0x8] sm:$0xff]
        %vm342 = vcmask 130048
        %v343 = vsel %vm342, %v340, 0.0
        %344 = vadd.xlane.f32.xlu0 %v343
        %v345 = vpop.xlane.xlu0 %344
        %v346 = vsel %vm342, %v341, 0.0
        %347 = vadd.xlane.f32.xlu0 %v346
        %v348 = vpop.xlane.xlu0 %347
        %v349 = vrsqrt.pop %v345
        %v350 = vrsqrt.pop %v348
        %v351 = vmul.f32 %v340, %v349
        %v352 = vmul.f32 %v341, %v350
        %v353 = vmul.f32 %v349, %v338
        %v354 = vmul.f32 %v350, %v339
        %v356 = vsel %vm342, %v351, 0
        %v359 = vsel %vm342, %v352, 0
        %361 = vmatprep.subr.mxu0 0.0
        %362 = vmatpush1.msra.mxu0 %v353
        %363 = vmatprep.subr.mxu0 0.0
        %364 = vmatpush1.msra.mxu0 %v354
        %365 = vmatprep.subr.mxu0 0.0
        %366 = vmatpush1.msra.mxu0 0.0
        %367 = vmatprep.subr.mxu0 0.0
        %368 = vmatpush1.msra.mxu0 0.0
        %369 = vmatprep.subr.mxu0 0.0
        %370 = vmatpush1.msra.mxu0 0.0
        %371 = vmatprep.subr.mxu0 0.0
        %372 = vmatpush1.msra.mxu0 0.0
        %373 = vmatprep.subr.mxu0 0.0
        %374 = vmatpush1.msra.mxu0 0.0
        %375 = vmatprep.subr.mxu0 0.0
        %376 = vmatpush1.msra.mxu0 0.0
        %377 = vmatprep.subr.mxu0 0.0
        %378 = vmatpush1.msra.mxu0 0.0
        %379 = vmatprep.subr.mxu0 0.0
        %380 = vmatpush1.msra.mxu0 0.0
        %381 = vmatprep.subr.mxu0 0.0
        %382 = vmatpush1.msra.mxu0 0.0
        %383 = vmatprep.subr.mxu0 0.0
        %384 = vmatpush1.msra.mxu0 0.0
        %385 = vmatprep.subr.mxu0 0.0
        %386 = vmatpush1.msra.mxu0 0.0
        %387 = vmatprep.subr.mxu0 0.0
        %388 = vmatpush1.msra.mxu0 0.0
        %389 = vmatprep.subr.mxu0 0.0
        %390 = vmatpush1.msra.mxu0 0.0
        %391 = vmatprep.subr.mxu0 0.0
        %392 = vmatpush1.msra.mxu0 0.0
        %393 = vmatprep.subr.mxu0 0.0
        %394 = vmatpush1.msra.mxu0 0.0
        %395 = vmatprep.subr.mxu0 0.0
        %396 = vmatpush1.msra.mxu0 0.0
        %397 = vmatprep.subr.mxu0 0.0
        %398 = vmatpush1.msra.mxu0 0.0
        %399 = vmatprep.subr.mxu0 0.0
        %400 = vmatpush1.msra.mxu0 0.0
        %401 = vmatprep.subr.mxu0 0.0
        %402 = vmatpush1.msra.mxu0 0.0
        %403 = vmatprep.subr.mxu0 0.0
        %404 = vmatpush1.msra.mxu0 0.0
        %405 = vmatprep.subr.mxu0 0.0
        %406 = vmatpush1.msra.mxu0 0.0
        %407 = vmatprep.subr.mxu0 0.0
        %408 = vmatpush1.msra.mxu0 0.0
        %409 = vmatprep.subr.mxu0 0.0
        %410 = vmatpush1.msra.mxu0 0.0
        %411 = vmatprep.subr.mxu0 0.0
        %412 = vmatpush1.msra.mxu0 0.0
        %413 = vmatprep.subr.mxu0 0.0
        %414 = vmatpush1.msra.mxu0 0.0
        %415 = vmatprep.subr.mxu0 0.0
        %416 = vmatpush1.msra.mxu0 0.0
        %417 = vmatprep.subr.mxu0 0.0
        %418 = vmatpush1.msra.mxu0 0.0
        %419 = vmatprep.subr.mxu0 0.0
        %420 = vmatpush1.msra.mxu0 0.0
        %421 = vmatprep.subr.mxu0 0.0
        %422 = vmatpush1.msra.mxu0 0.0
        %423 = vmatprep.subr.mxu0 0.0
        %424 = vmatpush1.msra.mxu0 0.0
        %425 = vmatprep.mubr.f32.mxu0 0.0
        %426 = vmatmul.mubr.f32.gmra.mrb[0].mxu0 %v356
        %v427 = vpop.f32.mrb[0].mxu0
        %v428 = vadd.f32 0.0, %v427
        %v429 = vpop.f32.mrb[0].mxu0
        %430 = vmatprep.mubr.f32.mxu0 0.0
        %431 = vmatmul.mubr.f32.gmra.mrb[0].mxu0 %v359
        %v432 = vpop.f32.mrb[0].mxu0
        %v433 = vadd.f32 0.0, %v432
        %v434 = vpop.f32.mrb[0].mxu0
        %435 = vdwg.mxu0
        %v436 = vsub.f32 %v338, %v428
        %v437 = vsub.f32 %v339, %v433
        %v438 = vmul.f32 %v349, %v436
        %v439 = vmul.f32 %v350, %v437
        %440 = vmatprep.subr.mxu0 0.0
        %441 = vmatpush1.msra.mxu0 %v438
        %442 = vmatprep.subr.mxu0 0.0
        %443 = vmatpush1.msra.mxu0 %v439
        %444 = vmatprep.subr.mxu0 0.0
        %445 = vmatpush1.msra.mxu0 0.0
        %446 = vmatprep.subr.mxu0 0.0
        %447 = vmatpush1.msra.mxu0 0.0
        %448 = vmatprep.subr.mxu0 0.0
        %449 = vmatpush1.msra.mxu0 0.0
        %450 = vmatprep.subr.mxu0 0.0
        %451 = vmatpush1.msra.mxu0 0.0
        %452 = vmatprep.subr.mxu0 0.0
        %453 = vmatpush1.msra.mxu0 0.0
        %454 = vmatprep.subr.mxu0 0.0
        %455 = vmatpush1.msra.mxu0 0.0
        %456 = vmatprep.subr.mxu0 0.0
        %457 = vmatpush1.msra.mxu0 0.0
        %458 = vmatprep.subr.mxu0 0.0
        %459 = vmatpush1.msra.mxu0 0.0
        %460 = vmatprep.subr.mxu0 0.0
        %461 = vmatpush1.msra.mxu0 0.0
        %462 = vmatprep.subr.mxu0 0.0
        %463 = vmatpush1.msra.mxu0 0.0
        %464 = vmatprep.subr.mxu0 0.0
        %465 = vmatpush1.msra.mxu0 0.0
        %466 = vmatprep.subr.mxu0 0.0
        %467 = vmatpush1.msra.mxu0 0.0
        %468 = vmatprep.subr.mxu0 0.0
        %469 = vmatpush1.msra.mxu0 0.0
        %470 = vmatprep.subr.mxu0 0.0
        %471 = vmatpush1.msra.mxu0 0.0
        %472 = vmatprep.subr.mxu0 0.0
        %473 = vmatpush1.msra.mxu0 0.0
        %474 = vmatprep.subr.mxu0 0.0
        %475 = vmatpush1.msra.mxu0 0.0
        %476 = vmatprep.subr.mxu0 0.0
        %477 = vmatpush1.msra.mxu0 0.0
        %478 = vmatprep.subr.mxu0 0.0
        %479 = vmatpush1.msra.mxu0 0.0
        %480 = vmatprep.subr.mxu0 0.0
        %481 = vmatpush1.msra.mxu0 0.0
        %482 = vmatprep.subr.mxu0 0.0
        %483 = vmatpush1.msra.mxu0 0.0
        %484 = vmatprep.subr.mxu0 0.0
        %485 = vmatpush1.msra.mxu0 0.0
        %486 = vmatprep.subr.mxu0 0.0
        %487 = vmatpush1.msra.mxu0 0.0
        %488 = vmatprep.subr.mxu0 0.0
        %489 = vmatpush1.msra.mxu0 0.0
        %490 = vmatprep.subr.mxu0 0.0
        %491 = vmatpush1.msra.mxu0 0.0
        %492 = vmatprep.subr.mxu0 0.0
        %493 = vmatpush1.msra.mxu0 0.0
        %494 = vmatprep.subr.mxu0 0.0
        %495 = vmatpush1.msra.mxu0 0.0
        %496 = vmatprep.subr.mxu0 0.0
        %497 = vmatpush1.msra.mxu0 0.0
        %498 = vmatprep.subr.mxu0 0.0
        %499 = vmatpush1.msra.mxu0 0.0
        %500 = vmatprep.subr.mxu0 0.0
        %501 = vmatpush1.msra.mxu0 0.0
        %502 = vmatprep.subr.mxu0 0.0
        %503 = vmatpush1.msra.mxu0 0.0
        %504 = vmatprep.mubr.f32.mxu0 0.0
        %505 = vmatmul.mubr.f32.gmra.mrb[0].mxu0 %v356
        %v506 = vpop.f32.mrb[0].mxu0
        %v507 = vadd.f32 0.0, %v506
        %v508 = vpop.f32.mrb[0].mxu0
        %509 = vmatprep.mubr.f32.mxu0 0.0
        %510 = vmatmul.mubr.f32.gmra.mrb[0].mxu0 %v359
        %v511 = vpop.f32.mrb[0].mxu0
        %v512 = vadd.f32 0.0, %v511
        %v513 = vpop.f32.mrb[0].mxu0
        %514 = vdwg.mxu0
        %v515 = vsub.f32 %v436, %v507
        %v516 = vsub.f32 %v437, %v512
        %v517 = vmul.f32 %v515, 2.0
        %v518 = vmul.f32 %v516, 2.0
        %v519 = vsub.f32 %v517, %v338
        %v520 = vsub.f32 %v518, %v339
        %523 = vrot.lane.b32.xlu0 %v436, 36
        %v524 = vpop.permute.xlu0 %523
        %525 = vrot.lane.b32.xlu0 %v437, 36
        %v526 = vpop.permute.xlu0 %525
        %531 = vrot.lane.b32.xlu0 %v519, 72
        %v532 = vpop.permute.xlu0 %531
        %533 = vrot.lane.b32.xlu0 %v520, 72
        %v534 = vpop.permute.xlu0 %533
        %vm537 = vcmask 293888
        %v538 = vsel %vm537, %v338, %v524
        %v539 = vsel %vm537, %v339, %v526
        %vm540 = vcmask 588800
        %v541 = vsel %vm540, %v538, %v532
        %v542 = vsel %vm540, %v539, %v534
        %v543 = vld [vmem:[#allocation8] sm:$0xff]
        %v544 = vld [vmem:[#allocation8 + $0x8] sm:$0xff]
        %v545 = vld [vmem:[#allocation8 + $0x10] sm:$0xff]
        %v546 = vld [vmem:[#allocation8 + $0x18] sm:$0xff]
        %v547 = vld [vmem:[#allocation8 + $0x20] sm:$0xff]
        %v548 = vld [vmem:[#allocation8 + $0x28] sm:$0xff]
        %v549 = vld [vmem:[#allocation8 + $0x30] sm:$0xff]
        %v550 = vld [vmem:[#allocation8 + $0x38] sm:$0xff]
        %v551 = vld [vmem:[#allocation8 + $0x40] sm:$0xff]
        %v552 = vld [vmem:[#allocation8 + $0x48] sm:$0xff]
        %v553 = vld [vmem:[#allocation8 + $0x50] sm:$0xff]
        %v554 = vld [vmem:[#allocation8 + $0x58] sm:$0xff]
        %v555 = vld [vmem:[#allocation8 + $0x60] sm:$0xff]
        %v556 = vld [vmem:[#allocation8 + $0x68] sm:$0xf]
        %v557 = vld [vmem:[%s4] sm:$0x1]
        %v559 = vlaneseq
        %v560 = vshrl.u32 %v559, 7
        %v561 = vsub.s32 0, %v560
        %v562 = vrot.slane %v557, %v561
        %vm564 = vcmask 883712
        %v566 = vsel %vm564, %v541, 0
        %v569 = vsel %vm564, %v542, 0
        %vm571 = vcmask 1043456
        %v573 = vsel %vm571, %v556, 0
        %575 = vmatprep.subr.mxu0 0.0
        %576 = vmatpush1.msra.mxu0 %v543
        %577 = vmatprep.subr.mxu0 0.0
        %578 = vmatpush1.msra.mxu0 %v544
        %579 = vmatprep.subr.mxu0 0.0
        %580 = vmatpush1.msra.mxu0 %v545
        %581 = vmatprep.subr.mxu0 0.0
        %582 = vmatpush1.msra.mxu0 %v546
        %583 = vmatprep.subr.mxu0 0.0
        %584 = vmatpush1.msra.mxu0 %v547
        %585 = vmatprep.subr.mxu0 0.0
        %586 = vmatpush1.msra.mxu0 %v548
        %587 = vmatprep.subr.mxu0 0.0
        %588 = vmatpush1.msra.mxu0 %v549
        %589 = vmatprep.subr.mxu0 0.0
        %590 = vmatpush1.msra.mxu0 %v550
        %591 = vmatprep.subr.mxu0 0.0
        %592 = vmatpush1.msra.mxu0 %v551
        %593 = vmatprep.subr.mxu0 0.0
        %594 = vmatpush1.msra.mxu0 %v552
        %595 = vmatprep.subr.mxu0 0.0
        %596 = vmatpush1.msra.mxu0 %v553
        %597 = vmatprep.subr.mxu0 0.0
        %598 = vmatpush1.msra.mxu0 %v554
        %599 = vmatprep.subr.mxu0 0.0
        %600 = vmatpush1.msra.mxu0 %v555
        %601 = vmatprep.subr.mxu0 0.0
        %602 = vmatpush1.msra.mxu0 %v573
        %603 = vmatprep.subr.mxu0 0.0
        %604 = vmatpush1.msra.mxu0 0.0
        %605 = vmatprep.subr.mxu0 0.0
        %606 = vmatpush1.msra.mxu0 0.0
        %607 = vmatprep.subr.mxu0 0.0
        %608 = vmatpush1.msra.mxu0 0.0
        %609 = vmatprep.subr.mxu0 0.0
        %610 = vmatpush1.msra.mxu0 0.0
        %611 = vmatprep.subr.mxu0 0.0
        %612 = vmatpush1.msra.mxu0 0.0
        %613 = vmatprep.subr.mxu0 0.0
        %614 = vmatpush1.msra.mxu0 0.0
        %615 = vmatprep.subr.mxu0 0.0
        %616 = vmatpush1.msra.mxu0 0.0
        %617 = vmatprep.subr.mxu0 0.0
        %618 = vmatpush1.msra.mxu0 0.0
        %619 = vmatprep.subr.mxu0 0.0
        %620 = vmatpush1.msra.mxu0 0.0
        %621 = vmatprep.subr.mxu0 0.0
        %622 = vmatpush1.msra.mxu0 0.0
        %623 = vmatprep.subr.mxu0 0.0
        %624 = vmatpush1.msra.mxu0 0.0
        %625 = vmatprep.subr.mxu0 0.0
        %626 = vmatpush1.msra.mxu0 0.0
        %627 = vmatprep.subr.mxu0 0.0
        %628 = vmatpush1.msra.mxu0 0.0
        %629 = vmatprep.subr.mxu0 0.0
        %630 = vmatpush1.msra.mxu0 0.0
        %631 = vmatprep.subr.mxu0 0.0
        %632 = vmatpush1.msra.mxu0 0.0
        %633 = vmatprep.subr.mxu0 0.0
        %634 = vmatpush1.msra.mxu0 0.0
        %635 = vmatprep.subr.mxu0 0.0
        %636 = vmatpush1.msra.mxu0 0.0
        %637 = vmatprep.subr.mxu0 0.0
        %638 = vmatpush1.msra.mxu0 0.0
        %639 = vmatprep.mubr.f32.mxu0 0.0
        %640 = vmatmul.mubr.f32.gmra.mrb[0].mxu0 %v566
        %v641 = vpop.f32.mrb[0].mxu0
        %v642 = vadd.f32 %v562, %v641
        %v643 = vpop.f32.mrb[0].mxu0
        %644 = vmatprep.mubr.f32.mxu0 0.0
        %645 = vmatmul.mubr.f32.gmra.mrb[0].mxu0 %v569
        %v646 = vpop.f32.mrb[0].mxu0
        %v647 = vadd.f32 %v562, %v646
        %v648 = vpop.f32.mrb[0].mxu0
        %649 = vdwg.mxu0
        %v650 = vxor.u32 %v642, 2147483648
        %v651 = vxor.u32 %v647, 2147483648
        %v652 = vmul.f32 %v650, 1.442695
        %v653 = vpow.pop %v652
        %v654 = vmul.f32 %v651, 1.442695
        %v655 = vpow.pop %v654
        %v656 = vadd.f32 %v653, 1.0
        %v657 = vadd.f32 %v655, 1.0
        %v658 = vrcp.pop %v656
        %v659 = vmul.f32 1.0, %v658
        %v660 = vrcp.pop %v657
        %v661 = vmul.f32 1.0, %v660
        %v662 = vtanh.pop %v642
        %v663 = vtanh.pop %v647
        %v664 = vld [vmem:[%s294] sm:$0xff]
        %v665 = vld [vmem:[%s294 + $0x8] sm:$0xff]
        %668 = vrot.lane.b32.xlu0 %v664, 32
        %v669 = vpop.permute.xlu0 %668
        %670 = vrot.lane.b32.xlu0 %v665, 32
        %v671 = vpop.permute.xlu0 %670
        %v674 = vmul.f32 %v659, %v669
        %v675 = vmul.f32 %v661, %v671
        %678 = vrot.lane.b32.xlu0 %v662, 32
        %v679 = vpop.permute.xlu0 %678
        %680 = vrot.lane.b32.xlu0 %v663, 32
        %v681 = vpop.permute.xlu0 %680
        %v684 = vmul.f32 %v659, %v679
        %v685 = vmul.f32 %v661, %v681
        %688 = vrot.lane.b32.xlu0 %v684, 32
        %v689 = vpop.permute.xlu0 %688
        %690 = vrot.lane.b32.xlu0 %v685, 32
        %v691 = vpop.permute.xlu0 %690
        %v694 = vadd.f32 %v674, %v689
        %v695 = vadd.f32 %v675, %v691
        %v696 = vtanh.pop %v694
        %v697 = vtanh.pop %v695
        %700 = vrot.lane.b32.xlu0 %v696, 32
        %v701 = vpop.permute.xlu0 %700
        %702 = vrot.lane.b32.xlu0 %v697, 32
        %v703 = vpop.permute.xlu0 %702
        %v706 = vmul.f32 %v659, %v701
        %v707 = vmul.f32 %v661, %v703
        %710 = vrot.lane.b32.xlu0 %v706, 64
        %v711 = vpop.permute.xlu0 %710
        %712 = vrot.lane.b32.xlu0 %v707, 64
        %v713 = vpop.permute.xlu0 %712
        %vm716 = vcmask 261120
        %v717 = vsel %vm716, %v711, %v694
        %v718 = vsel %vm716, %v713, %v695
        %vm719 = vcmask 523264
        %720 = vst.msk [vmem:[%s334] sm:$0xff] %vm719, %v717
        %721 = vst.msk [vmem:[%s334 + $0x8] sm:$0xff] %vm719, %v718
        %s722 = sand.u32 %s154, 1
        %s723 = scalar_lea.sflag [#allocation4], %s722
        %s724 = sand.u32 %s154, 1
        %s725 = smul.addr %s724, 16
        %s726 = scalar_lea.vmem [#allocation10], %s725
        // Predicated region
        $region57: #{tpu_custom_call.1} parent=39 // pred_check
          %p727 = pneg %p164
        $region58: #{tpu_custom_call.1} parent=39 // pred_check_branch
          %729 = sbr.rel (%p727) target = $region60
        $region59: #{tpu_custom_call.1} parent=39 // pred_region
          %s730 = smul.u32 2, %s26
          %s732 = ssub.s32 256, 256
          %733 = vsyncadd %s723, %s732
          %s734 = smul.addr %s730, 128
          %s735 = scalar_lea.hbm %s5, %s734
          %s736 = sshll.u32 %s726, 4
          %s737 = int_to_ptr.vmem [resolvable:$true] %s736
          %742 = dma.vmem_to_hbm [thread:$0]  %s737, 256, %s735, %s723, 128, 128, 8
        $region60: #{tpu_custom_call.1} parent=39 // pred_fallthru
          _
      $region40: #{tpu_custom_call.1} parent=5 // pred_fallthru
        _
      %p743 = scmp.le.s32.totalorder 2, %s21
      // Predicated region
      $region61: #{tpu_custom_call.1} parent=5 // pred_check
        %p744 = pneg %p743
      $region62: #{tpu_custom_call.1} parent=5 // pred_check_branch
        %746 = sbr.rel (%p744) target = $region64
      $region63: #{tpu_custom_call.1} parent=5 // pred_region
        %s747 = ssub.s32 %s21, 2
        // Predicated region
        $region65: #{tpu_custom_call.1} parent=63 // pred_check
          %p748 = pneg %p170
        $region66: #{tpu_custom_call.1} parent=63 // pred_check_branch
          %750 = sbr.rel (%p748) target = $region68
        $region67: #{tpu_custom_call.1} parent=63 // pred_region
          %s751 = sand.u32 %s155, 1
          %s752 = scalar_lea.sflag [#allocation4], %s751
          %s753 = sand.u32 %s155, 1
          %s754 = smul.addr %s753, 16
          %s755 = scalar_lea.vmem [#allocation10], %s754
          %756 = dma.done %s752, 256
        $region68: #{tpu_custom_call.1} parent=63 // pred_fallthru
          _
      $region64: #{tpu_custom_call.1} parent=5 // pred_fallthru
        _
    $region6: #{tpu_custom_call.1} parent=1 // loop_footer
      %s25 = sadd.s32 1, %s21
    $region7: #{tpu_custom_call.1} parent=1 // loop_footer_branch
      %20 = sbr.rel target = $region3
    $region8: #{tpu_custom_call.1} parent=1 // loop_exit
      _
    %757 = vsyncpa [#allocation3], 1
    %s758 = scalar_lea.sflag [#allocation3], 1
    %759 = vsyncpa %s758, 1
    %760 = vsyncpa [#allocation6], 1
    %s761 = scalar_lea.sflag [#allocation6], 1
    %762 = vsyncpa %s761, 1
    %763 = vsyncpa [#allocation9], 1
    %764 = vsyncpa [#allocation4], 1
    %s765 = scalar_lea.sflag [#allocation4], 1
    %766 = vsyncpa %s765, 1

</llo_original>
